<compile_context>
chip_gen: v7x
topology: tpu7x:2x2x1
jax: 0.10.0
libtpu: 0.0.40
codegen_flags: <defaults>
</compile_context>

<pallas_src>
import jax
import jax.numpy as jnp
from jax import lax
from jax.experimental import pallas as pl
from jax.experimental.pallas import tpu as pltpu

_NEG_INF = float("-inf")


def _make_infonce_kernel(n, tm, grid_m, gh, use_diag_block, needs_row_mask,
                         exp_dtype):
    # Tiles with logical index < last_full are guaranteed fully in-bounds.
    last_full = grid_m - 1 if needs_row_mask else grid_m

    def kernel(*refs):
        if use_diag_block:
            x_ref, xd_ref, o_ref, mcol_ref, scol_ref, racc_ref = refs
        else:
            x_ref, o_ref, mcol_ref, scol_ref, racc_ref = refs
            xd_ref = None

        c = pl.program_id(0)          # row-split id ("parallel": one per TC on v7x)
        i = pl.program_id(1)          # row-tile step within the split ("arbitrary")
        raw = c * gh + i              # logical row-tile index (may exceed grid_m-1)

        @pl.when(i == 0)
        def _init():
            mcol_ref[...] = jnp.full_like(mcol_ref, _NEG_INF)   # running col max
            scol_ref[...] = jnp.zeros_like(scol_ref)            # running col exp-sum
            racc_ref[...] = jnp.zeros_like(racc_ref)            # running row-loss sum

        def tile_body(masked):
            x = x_ref[...].astype(jnp.float32)                  # (tm, n), loaded once

            rid = lax.broadcasted_iota(jnp.int32, (tm, 1), 0)   # local row ids

            # ---- diagonal entries x[r, r] of this row tile -----------------------
            if use_diag_block:
                # O(tm^2) mask on the (tm, tm) diagonal block instead of O(tm*n).
                xd = xd_ref[...].astype(jnp.float32)
                rsq = lax.broadcasted_iota(jnp.int32, (tm, tm), 0)
                csq = lax.broadcasted_iota(jnp.int32, (tm, tm), 1)
                diag = jnp.sum(jnp.where(rsq == csq, xd, 0.0), axis=1,
                               keepdims=True)                   # (tm, 1)
            else:
                grow_all = raw * tm + rid                       # global row ids
                cid = lax.broadcasted_iota(jnp.int32, (tm, n), 1)
                diag = jnp.sum(jnp.where(cid == grow_all, x, 0.0), axis=1,
                               keepdims=True)

            # ---- row-wise logsumexp ----------------------------------------------
            m_r = jnp.max(x, axis=1, keepdims=True)
            e_r = jnp.exp((x - m_r).astype(exp_dtype)).astype(jnp.float32)
            # TODO(synk): consider jnp.dot(e_r, ones((n, 1))) to push this
            # cross-lane reduce onto the idle MXU once profiling shows XLU/VALU binds.
            lse_r = m_r + jnp.log(jnp.sum(e_r, axis=1, keepdims=True))

            row_term = lse_r - 2.0 * diag                       # (tm, 1)
            if masked:
                grow = raw * tm + rid
                valid = grow < n
                row_term = jnp.where(valid, row_term, 0.0)      # contain garbage rows
                x_c = jnp.where(valid, x, _NEG_INF)             # dead rows -> -inf
            else:
                x_c = x
            racc_ref[...] += jnp.sum(row_term, axis=0, keepdims=True)

            # ---- online column logsumexp update (flash-softmax style) -------------
            m_tile = jnp.max(x_c, axis=0, keepdims=True)        # (1, n)
            m_old = mcol_ref[...]
            m_new = jnp.maximum(m_old, m_tile)
            e_c = jnp.exp((x_c - m_new).astype(exp_dtype)).astype(jnp.float32)
            scol_ref[...] = scol_ref[...] * jnp.exp(m_old - m_new) + jnp.sum(
                e_c, axis=0, keepdims=True)
            mcol_ref[...] = m_new

        # Fully in-bounds tiles: no per-row compare/select work.
        @pl.when(raw < last_full)
        def _full_tile():
            tile_body(masked=False)

        if needs_row_mask:
            # Only the single partial tile pays the masking cost.
            @pl.when(raw == grid_m - 1)
            def _partial_tile():
                tile_body(masked=True)

        # raw >= grid_m (odd tile count split across 2 cores): duplicate tile —
        # skip accumulation entirely; the clamped index_map keeps its DMA in bounds.

        @pl.when(i == gh - 1)
        def _finalize():
            # Per-split partial stats; the wrapper merges the splits with O(n) JAX.
            o_ref[pl.ds(0, 1), :] = mcol_ref[...]
            o_ref[pl.ds(1, 1), :] = scol_ref[...]
            o_ref[pl.ds(2, 1), :] = jnp.broadcast_to(racc_ref[...], (1, n))

    return kernel


def _tpu_vmem_capacity_bytes():
    try:
        info = pltpu.get_tpu_info()
        for attr in ("vmem_capacity_bytes", "vmem_size_bytes", "vmem_bytes"):
            cap = getattr(info, attr, None)
            if cap:
                return int(cap)
    except Exception:
        pass
    return 64 << 20   # conservative (v7x-sized) default


def _choose_tm(n, itemsize, max_tile_bytes):
    """Row-tile size: packed-layout legal, f32 working row <= max_tile_bytes."""
    if itemsize >= 4:
        min_rows = 8
    elif itemsize == 2:
        min_rows = 16      # bf16 packed sublane tile
    else:
        min_rows = 32      # int8 / fp8 packed sublane tile
    if n <= min_rows:
        return n           # block dim == full array dim is always legal
    cap = max(min_rows, max_tile_bytes // (4 * n))   # f32 temporaries dominate
    tm = min_rows
    for cand in (16, 32, 64, 128, 256, 512, 1024):
        if min_rows <= cand <= n and cand <= cap:
            tm = cand
    return tm


def info_nce_loss(x, *, exp_dtype=jnp.float32, max_tile_bytes=None):
    """InfoNCE loss for an (n, n) similarity-logits matrix. Returns an f32 scalar.

    loss = CE(x, arange(n), mean) + CE(x.T, arange(n), mean)

    Perf notes:
      * Feed `x` as bfloat16 to halve HBM traffic (biggest lever on v5e);
        all reductions stay in f32 inside the kernel.
      * exp_dtype=jnp.bfloat16 halves EUP (exp) cost on v6e/v7x but rounds the
        exp argument (~1e-3 LSE shift) — kept f32 by default for accuracy.
    """
    n, m = x.shape
    assert n == m, "InfoNCE expects a square similarity matrix"
    itemsize = jnp.dtype(x.dtype).itemsize

    # Generation-aware VMEM budget: 128 MiB (v5e/v6e) vs 64 MiB (v7x) per core.
    vmem_cap = _tpu_vmem_capacity_bytes()
    big_vmem = vmem_cap >= (100 << 20)
    if max_tile_bytes is None:
        max_tile_bytes = (8 << 20) if big_vmem else (4 << 20)
    vmem_ceiling = (96 << 20) if big_vmem else (40 << 20)

    tm = _choose_tm(n, itemsize, max_tile_bytes)
    grid_m = pl.cdiv(n, tm)
    needs_row_mask = (n % tm) != 0
    # The (tm, tm) diagonal block needs a 128-multiple lane dim; for grid_m == 1
    # the row tile already holds the whole matrix, so fall back to the iota mask.
    use_diag_block = (tm % 128 == 0) and (grid_m > 1)

    # Split the rows across 2 TensorCores on v7x ("parallel" leading axis);
    # on single-core chips this is just two short sequential passes.
    num_splits = 2 if grid_m >= 2 else 1
    gh = pl.cdiv(grid_m, num_splits)

    kernel = _make_infonce_kernel(n, tm, grid_m, gh, use_diag_block,
                                  needs_row_mask, exp_dtype)

    def row_idx(c, i):
        return (jnp.minimum(c * gh + i, grid_m - 1), 0)

    in_specs = [pl.BlockSpec((tm, n), row_idx)]
    operands = [x]
    if use_diag_block:
        def diag_idx(c, i):
            t = jnp.minimum(c * gh + i, grid_m - 1)
            return (t, t)
        in_specs.append(pl.BlockSpec((tm, tm), diag_idx))
        operands.append(x)

    vmem_est = (2 * tm * n * itemsize                      # double-buffered row tile
                + (2 * tm * tm * itemsize if use_diag_block else 0)
                + 4 * tm * n * 4                           # in-kernel f32 temporaries
                + 4 * n * 4                                # column (max, sum) scratch
                + 2 * 8 * n * 4                            # double-buffered stats output
                + (2 << 20))
    vmem_limit = int(min(max(vmem_est, 16 << 20), vmem_ceiling))

    stats = pl.pallas_call(
        kernel,
        out_shape=jax.ShapeDtypeStruct((num_splits, 8, n), jnp.float32),
        grid_spec=pltpu.PrefetchScalarGridSpec(
            num_scalar_prefetch=0,
            grid=(num_splits, gh),
            in_specs=in_specs,
            out_specs=pl.BlockSpec((None, 8, n), lambda c, i: (c, 0, 0)),
            scratch_shapes=[
                pltpu.VMEM((1, n), jnp.float32),   # running column max
                pltpu.VMEM((1, n), jnp.float32),   # running column exp-sum
                pltpu.VMEM((1, 1), jnp.float32),   # running row-loss partial sum
            ],
        ),
        compiler_params=pltpu.CompilerParams(
            dimension_semantics=("parallel", "arbitrary"),
            vmem_limit_bytes=vmem_limit,
        ),
        cost_estimate=pl.CostEstimate(
            flops=8 * n * n,
            transcendentals=2 * n * n,
            bytes_accessed=n * n * itemsize + num_splits * 8 * n * 4,
        ),
    )(*operands)

    # O(n) merge of the per-split flash-style column statistics + row-loss sums.
    m_c = stats[:, 0, :]                                   # per-split column max
    s_c = stats[:, 1, :]                                   # per-split column exp-sum
    r_sum = stats[:, 2, 0]                                 # per-split row-loss sum
    m_all = jnp.max(m_c, axis=0)
    s_all = jnp.sum(jnp.exp(m_c - m_all[None, :]) * s_c, axis=0)
    lse_c = m_all + jnp.log(s_all)
    return (jnp.sum(r_sum) + jnp.sum(lse_c)) / jnp.float32(n)


def _info_nce_ref(x):
    """Pure-JAX reference for sanity checking."""
    x = x.astype(jnp.float32)
    diag = jnp.diagonal(x)
    lse_r = jax.scipy.special.logsumexp(x, axis=1)
    lse_c = jax.scipy.special.logsumexp(x, axis=0)
    return jnp.mean(lse_r - diag) + jnp.mean(lse_c - diag)


def _check(x, atol=1e-3, rtol=1e-4, **kw):
    out = jax.block_until_ready(info_nce_loss(x, **kw))
    ref = jax.block_until_ready(_info_nce_ref(x))
    assert jnp.allclose(out, ref, atol=atol, rtol=rtol), (x.shape, out, ref)


if __name__ == "__main__":
    key = jax.random.PRNGKey(0)
    k1, k2, k3, k4 = jax.random.split(key, 4)

    # 1) Tiny square matrix: single tile, no split, iota-diagonal fallback.
    x1 = jax.random.normal(k1, (8, 8), dtype=jnp.float32)
    _check(x1)

    # 2) Partial last tile + diagonal-block path + 2-way row split.
    x2 = 4.0 * jax.random.normal(k2, (200, 200), dtype=jnp.float32)
    _check(x2)

    # 3) Forced small tile -> odd tile count: multi-step online column LSE,
    #    duplicate-tile skip and clamped DMA index on the second split.
    x3 = 2.0 * jax.random.normal(k3, (384, 384), dtype=jnp.float32)
    _check(x3, max_tile_bytes=250_000)

    # 4) bfloat16 input (halves HBM traffic; reductions stay f32 in-kernel).
    x4 = jax.random.normal(k4, (200, 200), dtype=jnp.bfloat16)
    _check(x4, atol=2e-3)

    print("KERNEL_OK")
</pallas_src>

<mosaic_0001>
module attributes {stable_mosaic.version = 11 : i64} {
  func.func @kernel(%arg0: i32, %arg1: i32, %arg2: memref<8x8xf32, #tpu.memory_space<vmem>>, %arg3: memref<1x8x8xf32, #tpu.memory_space<vmem>>, %arg4: memref<1x8xf32, #tpu.memory_space<vmem>>, %arg5: memref<1x8xf32, #tpu.memory_space<vmem>>, %arg6: memref<1x1xf32, #tpu.memory_space<vmem>>) attributes {dimension_semantics = [#tpu.dimension_semantics<parallel>, #tpu.dimension_semantics<arbitrary>], iteration_bounds = array<i64: 1, 1>, scalar_prefetch = 0 : i64, scratch_operands = 3 : i64, tpu.core_type = #tpu.core_type<tc>, window_params = [{transform_indices = @transform_0, window_bounds = array<i64: 8, 8>}, {transform_indices = @transform_1, window_bounds = array<i64: 1, 8, 8>}]} {
    %c1_i32 = arith.constant 1 : i32
    %0 = arith.muli %arg0, %c1_i32 : i32
    %1 = arith.addi %0, %arg1 : i32
    %c0_i32 = arith.constant 0 : i32
    %2 = arith.cmpi eq, %arg1, %c0_i32 : i32
    %3 = arith.extui %2 : i1 to i32
    %c0_i32_0 = arith.constant 0 : i32
    %4 = arith.cmpi ne, %3, %c0_i32_0 : i32
    scf.if %4 {
      %cst = arith.constant 0xFF800000 : f32
      %11 = vector.broadcast %cst : f32 to vector<1x8xf32>
      %c0 = arith.constant 0 : index
      %c0_5 = arith.constant 0 : index
      %12 = vector.load %arg4[%c0, %c0_5] : memref<1x8xf32, #tpu.memory_space<vmem>>, vector<1x8xf32>
      tpu.vector_store %arg4[%c0, %c0_5], %11 {strides = array<i32>} : memref<1x8xf32, #tpu.memory_space<vmem>>, vector<1x8xf32>,
      %cst_6 = arith.constant 0.000000e+00 : f32
      %13 = vector.broadcast %cst_6 : f32 to vector<1x8xf32>
      %c0_7 = arith.constant 0 : index
      %c0_8 = arith.constant 0 : index
      %14 = vector.load %arg5[%c0_7, %c0_8] : memref<1x8xf32, #tpu.memory_space<vmem>>, vector<1x8xf32>
      tpu.vector_store %arg5[%c0_7, %c0_8], %13 {strides = array<i32>} : memref<1x8xf32, #tpu.memory_space<vmem>>, vector<1x8xf32>,
      %cst_9 = arith.constant 0.000000e+00 : f32
      %15 = vector.broadcast %cst_9 : f32 to vector<1x1xf32>
      %c0_10 = arith.constant 0 : index
      %c0_11 = arith.constant 0 : index
      %16 = vector.load %arg6[%c0_10, %c0_11] : memref<1x1xf32, #tpu.memory_space<vmem>>, vector<1x1xf32>
      tpu.vector_store %arg6[%c0_10, %c0_11], %15 {strides = array<i32>} : memref<1x1xf32, #tpu.memory_space<vmem>>, vector<1x1xf32>,
    } else {
    }
    %c1_i32_1 = arith.constant 1 : i32
    %5 = arith.cmpi slt, %1, %c1_i32_1 : i32
    %6 = arith.extui %5 : i1 to i32
    %c0_i32_2 = arith.constant 0 : i32
    %7 = arith.cmpi ne, %6, %c0_i32_2 : i32
    scf.if %7 {
      %c0 = arith.constant 0 : index
      %c0_5 = arith.constant 0 : index
      %11 = vector.load %arg2[%c0, %c0_5] : memref<8x8xf32, #tpu.memory_space<vmem>>, vector<8x8xf32>
      %12 = tpu.iota {dimensions = array<i32: 0>} : vector<8x1xi32>
      %c8_i32 = arith.constant 8 : i32
      %13 = arith.muli %1, %c8_i32 : i32
      %14 = vector.broadcast %13 : i32 to vector<8x1xi32>
      %15 = arith.addi %14, %12 : vector<8x1xi32>
      %16 = tpu.iota {dimensions = array<i32: 1>} : vector<8x8xi32>
      %17 = vector.broadcast %15 : vector<8x1xi32> to vector<8x8xi32>
      %18 = arith.cmpi eq, %16, %17 : vector<8x8xi32>
      %cst = arith.constant 0.000000e+00 : f32
      %19 = vector.broadcast %cst : f32 to vector<8x8xf32>
      %20 = arith.select %18, %11, %19 : vector<8x8xi1>, vector<8x8xf32>
      %cst_6 = arith.constant dense<0.000000e+00> : vector<8xf32>
      %21 = vector.multi_reduction <add>, %20, %cst_6 [1] : vector<8x8xf32> to vector<8xf32>
      %22 = vector.shape_cast %21 : vector<8xf32> to vector<8x1xf32>
      %cst_7 = arith.constant dense<0xFF800000> : vector<8xf32>
      %23 = vector.multi_reduction <maximumf>, %11, %cst_7 [1] : vector<8x8xf32> to vector<8xf32>
      %24 = vector.shape_cast %23 : vector<8xf32> to vector<8x1xf32>
      %25 = vector.broadcast %24 : vector<8x1xf32> to vector<8x8xf32>
      %26 = arith.subf %11, %25 : vector<8x8xf32>
      %27 = math.exp %26 : vector<8x8xf32>
      %cst_8 = arith.constant dense<0.000000e+00> : vector<8xf32>
      %28 = vector.multi_reduction <add>, %27, %cst_8 [1] : vector<8x8xf32> to vector<8xf32>
      %29 = vector.shape_cast %28 : vector<8xf32> to vector<8x1xf32>
      %30 = math.log %29 : vector<8x1xf32>
      %31 = arith.addf %24, %30 : vector<8x1xf32>
      %cst_9 = arith.constant 2.000000e+00 : f32
      %32 = vector.broadcast %cst_9 : f32 to vector<8x1xf32>
      %33 = arith.mulf %32, %22 : vector<8x1xf32>
      %34 = arith.subf %31, %33 : vector<8x1xf32>
      %c0_10 = arith.constant 0 : index
      %c0_11 = arith.constant 0 : index
      %35 = vector.load %arg6[%c0_10, %c0_11] : memref<1x1xf32, #tpu.memory_space<vmem>>, vector<1x1xf32>
      %cst_12 = arith.constant dense<0.000000e+00> : vector<1xf32>
      %36 = vector.multi_reduction <add>, %34, %cst_12 [0] : vector<8x1xf32> to vector<1xf32>
      %37 = vector.shape_cast %36 : vector<1xf32> to vector<1x1xf32>
      %38 = arith.addf %35, %37 : vector<1x1xf32>
      %c0_13 = arith.constant 0 : index
      %c0_14 = arith.constant 0 : index
      %39 = vector.load %arg6[%c0_13, %c0_14] : memref<1x1xf32, #tpu.memory_space<vmem>>, vector<1x1xf32>
      tpu.vector_store %arg6[%c0_13, %c0_14], %38 {strides = array<i32>} : memref<1x1xf32, #tpu.memory_space<vmem>>, vector<1x1xf32>,
      %cst_15 = arith.constant dense<0xFF800000> : vector<8xf32>
      %40 = vector.multi_reduction <maximumf>, %11, %cst_15 [0] : vector<8x8xf32> to vector<8xf32>
      %41 = vector.shape_cast %40 : vector<8xf32> to vector<1x8xf32>
      %c0_16 = arith.constant 0 : index
      %c0_17 = arith.constant 0 : index
      %42 = vector.load %arg4[%c0_16, %c0_17] : memref<1x8xf32, #tpu.memory_space<vmem>>, vector<1x8xf32>
      %43 = arith.maximumf %42, %41 : vector<1x8xf32>
      %44 = vector.broadcast %43 : vector<1x8xf32> to vector<8x8xf32>
      %45 = arith.subf %11, %44 : vector<8x8xf32>
      %46 = math.exp %45 : vector<8x8xf32>
      %c0_18 = arith.constant 0 : index
      %c0_19 = arith.constant 0 : index
      %47 = vector.load %arg5[%c0_18, %c0_19] : memref<1x8xf32, #tpu.memory_space<vmem>>, vector<1x8xf32>
      %48 = arith.subf %42, %43 : vector<1x8xf32>
      %49 = math.exp %48 : vector<1x8xf32>
      %50 = arith.mulf %47, %49 : vector<1x8xf32>
      %cst_20 = arith.constant dense<0.000000e+00> : vector<8xf32>
      %51 = vector.multi_reduction <add>, %46, %cst_20 [0] : vector<8x8xf32> to vector<8xf32>
      %52 = vector.shape_cast %51 : vector<8xf32> to vector<1x8xf32>
      %53 = arith.addf %50, %52 : vector<1x8xf32>
      %c0_21 = arith.constant 0 : index
      %c0_22 = arith.constant 0 : index
      %54 = vector.load %arg5[%c0_21, %c0_22] : memref<1x8xf32, #tpu.memory_space<vmem>>, vector<1x8xf32>
      tpu.vector_store %arg5[%c0_21, %c0_22], %53 {strides = array<i32>} : memref<1x8xf32, #tpu.memory_space<vmem>>, vector<1x8xf32>,
      %c0_23 = arith.constant 0 : index
      %c0_24 = arith.constant 0 : index
      %55 = vector.load %arg4[%c0_23, %c0_24] : memref<1x8xf32, #tpu.memory_space<vmem>>, vector<1x8xf32>
      tpu.vector_store %arg4[%c0_23, %c0_24], %43 {strides = array<i32>} : memref<1x8xf32, #tpu.memory_space<vmem>>, vector<1x8xf32>,
    } else {
    }
    %c0_i32_3 = arith.constant 0 : i32
    %8 = arith.cmpi eq, %arg1, %c0_i32_3 : i32
    %9 = arith.extui %8 : i1 to i32
    %c0_i32_4 = arith.constant 0 : i32
    %10 = arith.cmpi ne, %9, %c0_i32_4 : i32
    scf.if %10 {
      %c0 = arith.constant 0 : index
      %c0_5 = arith.constant 0 : index
      %11 = vector.load %arg4[%c0, %c0_5] : memref<1x8xf32, #tpu.memory_space<vmem>>, vector<1x8xf32>
      %c0_6 = arith.constant 0 : index
      %c0_7 = arith.constant 0 : index
      %c0_8 = arith.constant 0 : index
      %12 = vector.load %arg3[%c0_6, %c0_7, %c0_8] : memref<1x8x8xf32, #tpu.memory_space<vmem>>, vector<1x1x8xf32>
      %13 = vector.shape_cast %12 : vector<1x1x8xf32> to vector<1x8xf32>
      %14 = vector.shape_cast %11 : vector<1x8xf32> to vector<1x1x8xf32>
      tpu.vector_store %arg3[%c0_6, %c0_7, %c0_8], %14 {strides = array<i32>} : memref<1x8x8xf32, #tpu.memory_space<vmem>>, vector<1x1x8xf32>,
      %c0_9 = arith.constant 0 : index
      %c0_10 = arith.constant 0 : index
      %15 = vector.load %arg5[%c0_9, %c0_10] : memref<1x8xf32, #tpu.memory_space<vmem>>, vector<1x8xf32>
      %c0_11 = arith.constant 0 : index
      %c1 = arith.constant 1 : index
      %c0_12 = arith.constant 0 : index
      %16 = vector.load %arg3[%c0_11, %c1, %c0_12] : memref<1x8x8xf32, #tpu.memory_space<vmem>>, vector<1x1x8xf32>
      %17 = vector.shape_cast %16 : vector<1x1x8xf32> to vector<1x8xf32>
      %18 = vector.shape_cast %15 : vector<1x8xf32> to vector<1x1x8xf32>
      tpu.vector_store %arg3[%c0_11, %c1, %c0_12], %18 {strides = array<i32>} : memref<1x8x8xf32, #tpu.memory_space<vmem>>, vector<1x1x8xf32>,
      %c0_13 = arith.constant 0 : index
      %c0_14 = arith.constant 0 : index
      %19 = vector.load %arg6[%c0_13, %c0_14] : memref<1x1xf32, #tpu.memory_space<vmem>>, vector<1x1xf32>
      %20 = vector.shape_cast %19 : vector<1x1xf32> to vector<1x1xf32>
      %21 = vector.broadcast %20 : vector<1x1xf32> to vector<1x8xf32>
      %c0_15 = arith.constant 0 : index
      %c2 = arith.constant 2 : index
      %c0_16 = arith.constant 0 : index
      %22 = vector.load %arg3[%c0_15, %c2, %c0_16] : memref<1x8x8xf32, #tpu.memory_space<vmem>>, vector<1x1x8xf32>
      %23 = vector.shape_cast %22 : vector<1x1x8xf32> to vector<1x8xf32>
      %24 = vector.shape_cast %21 : vector<1x8xf32> to vector<1x1x8xf32>
      tpu.vector_store %arg3[%c0_15, %c2, %c0_16], %24 {strides = array<i32>} : memref<1x8x8xf32, #tpu.memory_space<vmem>>, vector<1x1x8xf32>,
    } else {
    }
    return
  }
  func.func @transform_0(%arg0: i32, %arg1: i32) -> (i32, i32) {
    %c1_i32 = arith.constant 1 : i32
    %0 = arith.muli %arg0, %c1_i32 : i32
    %1 = arith.addi %0, %arg1 : i32
    %c0_i32 = arith.constant 0 : i32
    %2 = arith.minsi %1, %c0_i32 : i32
    %c0_i32_0 = arith.constant 0 : i32
    %c0_i32_1 = arith.constant 0 : i32
    return %2, %c0_i32_0 : i32, i32
  }
  func.func @transform_1(%arg0: i32, %arg1: i32) -> (i32, i32, i32) {
    %c0_i32 = arith.constant 0 : i32
    %c0_i32_0 = arith.constant 0 : i32
    %c0_i32_1 = arith.constant 0 : i32
    return %arg0, %c0_i32, %c0_i32_0 : i32, i32, i32
  }
}

</mosaic_0001>

<llo_original>
// kernel: tpu_custom_call.1
$region0: #{tpu_custom_call.1}
  #allocation0 [shape = 'u32[]', space=smem, size = 0x4, offset = 0x4, fixed_abs, tag = 'smem constant byte address 0x4 - core index']
  #allocation1 [shape = 'u32[144,128]{1,0:T(1,128)}', space=vmem, size = 0x12000, scoped, tag = 'internal scratch']
  #allocation2 [shape = 'f32[1,8]{1,0:T(1,128)}', space=vmem, size = 0x200, scoped, tag = 'scratch operand']
  #allocation3 [shape = 'f32[1,8]{1,0:T(1,128)}', space=vmem, size = 0x200, scoped, tag = 'scratch operand']
  #allocation4 [shape = 'f32[1,1]{1,0:T(1,128)}', space=vmem, size = 0x200, scoped, tag = 'scratch operand']
  %s0 = inlined_call_operand.hbm [shape: f32[8,8], index: 0, kind: input, shape index: {}]
  %s1 = inlined_call_operand.hbm [shape: f32[1,8,8], index: 1, kind: output, shape index: {}]
  %s2 = sld [smem:[#allocation0]]
  $region30: #{tpu_custom_call.1} parent=0
    _
  %s4 = ssub.s32 1, %s2
  %s5 = scalar_select 0, %s4, %s2
  $region1: #{tpu_custom_call.1} parent=0
    #allocation5 [shape = 'u8[4096]{0}', space=vmem, size = 0x1000, scoped, tag = 'input window, operand 0, single buffered']
    #allocation6 [shape = 's32[1]{0}', space=sflag, size = 0x4, scoped, tag = 'scoped memory for tpu_custom_call.1']
    #allocation7 [shape = 's32[1]{0}', space=sflag, size = 0x4, scoped, tag = 'scoped memory for tpu_custom_call.1']
    #allocation8 [shape = 'u8[4096]{0}', space=vmem, size = 0x1000, scoped, tag = 'output window, operand 0, single buffered']
    %6 = vsyncpa [#allocation6], 0
    %7 = vsyncpa [#allocation7], 0
    // Predicated region
    $region2: #{tpu_custom_call.1} parent=1 // pred_check
      _
    $region3: #{tpu_custom_call.1} parent=1 // pred_check_branch
      %9 = sbr.rel (0) target = $region5
    $region4: #{tpu_custom_call.1} parent=1 // pred_region
      %s10 = sadd.s32 0, 0
      %p11 = scmp.lt.s32.totalorder %s10, 0
      %s12 = scalar_select %p11, %s10, 0
      %s14 = ssub.s32 128, 128
      %15 = vsyncadd [#allocation6], %s14
      %s16 = smul.addr %s12, 128
      %s17 = scalar_lea.hbm %s0, %s16
      %s19 = sshll.u32 [#allocation5], 4
      %s20 = int_to_ptr.vmem [resolvable:$true] %s19
      %22 = dma.hbm_to_vmem [thread:$0]  %s17, 128, %s20, [#allocation6]
    $region5: #{tpu_custom_call.1} parent=1 // pred_fallthru
      _
    // Predicated region
    $region6: #{tpu_custom_call.1} parent=1 // pred_check
      _
    $region7: #{tpu_custom_call.1} parent=1 // pred_check_branch
      %24 = sbr.rel (0) target = $region9
    $region8: #{tpu_custom_call.1} parent=1 // pred_region
      %25 = dma.done [#allocation6], 128
    $region9: #{tpu_custom_call.1} parent=1 // pred_fallthru
      _
    %s26 = sadd.s32 0, 0
    %p27 = scmp.lt.s32.totalorder %s26, 0
    %s28 = scalar_select %p27, %s26, 0
    %s29 = sadd.s32 0, 0
    %p30 = scmp.eq.s32.totalorder 0, 0
    // Predicated region
    $region10: #{tpu_custom_call.1} parent=1 // pred_check
      %p31 = pneg %p30
    $region11: #{tpu_custom_call.1} parent=1 // pred_check_branch
      %33 = sbr.rel (%p31) target = $region13
    $region12: #{tpu_custom_call.1} parent=1 // pred_region
      %vm34 = vcmask 57344
      %35 = vst.msk [vmem:[#allocation2] sm:$0x1] %vm34, -inf
      %36 = vst.msk [vmem:[#allocation3] sm:$0x1] %vm34, 0.0
      %vm37 = vcmask 0
      %38 = vst.msk [vmem:[#allocation4] sm:$0x1] %vm37, 0.0
    $region13: #{tpu_custom_call.1} parent=1 // pred_fallthru
      _
    %p39 = scmp.lt.s32.totalorder %s29, 1
    // Predicated region
    $region14: #{tpu_custom_call.1} parent=1 // pred_check
      %p40 = pneg %p39
    $region15: #{tpu_custom_call.1} parent=1 // pred_check_branch
      %42 = sbr.rel (%p40) target = $region17
    $region16: #{tpu_custom_call.1} parent=1 // pred_region
      %v43 = vld [vmem:[#allocation5] sm:$0xff]
      %v44 = vlaneseq
      %v45 = vshrl.u32 %v44, 7
      %s46 = smul.u32 %s29, 8
      %v47 = vstv %s46
      %v48 = vadd.s32 %v47, %v45
      %v49 = vlaneseq
      %v50 = vand.u32 %v49, 127
      %vm51 = vcmp.eq.s32.totalorder %v50, %v48
      %v52 = vsel %vm51, %v43, 0.0
      %vm53 = vcmask 64512
      %v54 = vsel %vm53, %v52, 0.0
      %55 = vadd.xlane.f32.xlu0 %v54
      %v56 = vpop.xlane.xlu0 %55
      %v57 = vsel %vm53, %v43, -inf
      %58 = vmax.xlane.f32.xlu0 %v57
      %v59 = vpop.xlane.xlu0 %58
      %v60 = vsub.f32 %v43, %v59
      %v61 = vmul.f32 %v60, 1.442695
      %v62 = vpow.pop %v61
      %v63 = vsel %vm53, %v62, 0.0
      %64 = vadd.xlane.f32.xlu0 %v63
      %v65 = vpop.xlane.xlu0 %64
      %v66 = vlog2.pop %v65
      %v67 = vmul.f32 %v66, 0.6931472
      %v68 = vadd.f32 %v59, %v67
      %v69 = vmul.f32 %v56, 2.0
      %v70 = vsub.f32 %v68, %v69
      %v71 = vld [vmem:[#allocation4] sm:$0x1]
      %v72 = vrot.slane %v70, 4
      %v73 = vadd.f32 %v70, %v72
      %v74 = vrot.slane %v73, 2
      %v75 = vadd.f32 %v73, %v74
      %v76 = vrot.slane %v75, 1
      %v77 = vadd.f32 %v75, %v76
      %v78 = vadd.f32 %v71, %v77
      %vm79 = vcmask 0
      %80 = vst.msk [vmem:[#allocation4] sm:$0x1] %vm79, %v78
      %v81 = vrot.slane %v57, 4
      %v82 = vmax.f32 %v57, %v81
      %v83 = vrot.slane %v82, 2
      %v84 = vmax.f32 %v82, %v83
      %v85 = vrot.slane %v84, 1
      %v86 = vmax.f32 %v84, %v85
      %v87 = vld [vmem:[#allocation2] sm:$0x1]
      %v88 = vmax.f32 %v87, %v86
      %v90 = vlaneseq
      %v91 = vshrl.u32 %v90, 7
      %v92 = vsub.s32 0, %v91
      %v93 = vrot.slane %v88, %v92
      %v95 = vsub.f32 %v43, %v93
      %v96 = vmul.f32 %v95, 1.442695
      %v97 = vpow.pop %v96
      %v98 = vld [vmem:[#allocation3] sm:$0x1]
      %v99 = vsub.f32 %v87, %v88
      %v100 = vmul.f32 %v99, 1.442695
      %v101 = vpow.pop %v100
      %v102 = vmul.f32 %v98, %v101
      %v103 = vsel %vm53, %v97, 0.0
      %v104 = vrot.slane %v103, 4
      %v105 = vadd.f32 %v103, %v104
      %v106 = vrot.slane %v105, 2
      %v107 = vadd.f32 %v105, %v106
      %v108 = vrot.slane %v107, 1
      %v109 = vadd.f32 %v107, %v108
      %v110 = vadd.f32 %v102, %v109
      %vm111 = vcmask 57344
      %112 = vst.msk [vmem:[#allocation3] sm:$0x1] %vm111, %v110
      %113 = vst.msk [vmem:[#allocation2] sm:$0x1] %vm111, %v88
    $region17: #{tpu_custom_call.1} parent=1 // pred_fallthru
      _
    // Predicated region
    $region18: #{tpu_custom_call.1} parent=1 // pred_check
      %p114 = pneg %p30
    $region19: #{tpu_custom_call.1} parent=1 // pred_check_branch
      %116 = sbr.rel (%p114) target = $region21
    $region20: #{tpu_custom_call.1} parent=1 // pred_region
      %v117 = vld [vmem:[#allocation2] sm:$0x1]
      %vm118 = vcmask 57344
      %119 = vst.msk [vmem:[#allocation8] sm:$0x1] %vm118, %v117
      %v120 = vld [vmem:[#allocation3] sm:$0x1]
      %121 = vst.msk [vmem:[#allocation8 + $0x1] sm:$0x1] %vm118, %v120
      %v122 = vld [vmem:[#allocation4] sm:$0x1]
      %124 = vset.pattern.permute.xlu0 0
      %125 = vperm.xlu0 %124, %v122
      %v126 = vpop.permute.xlu0 %125
      %v128 = vlaneseq
      %v129 = vshrl.u32 %v128, 7
      %v130 = vsub.s32 0, %v129
      %v131 = vrot.slane %v126, %v130
      %132 = vst.msk [vmem:[#allocation8 + $0x2] sm:$0x1] %vm118, %v131
    $region21: #{tpu_custom_call.1} parent=1 // pred_fallthru
      _
    // Predicated region
    $region22: #{tpu_custom_call.1} parent=1 // pred_check
      _
    $region23: #{tpu_custom_call.1} parent=1 // pred_check_branch
      %134 = sbr.rel (0) target = $region25
    $region24: #{tpu_custom_call.1} parent=1 // pred_region
      %s136 = ssub.s32 128, 128
      %137 = vsyncadd [#allocation7], %s136
      %s139 = sshll.u32 [#allocation8], 4
      %s140 = int_to_ptr.vmem [resolvable:$true] %s139
      %142 = dma.vmem_to_hbm [thread:$0]  %s140, 128, %s1, [#allocation7]
    $region25: #{tpu_custom_call.1} parent=1 // pred_fallthru
      _
    // Predicated region
    $region26: #{tpu_custom_call.1} parent=1 // pred_check
      _
    $region27: #{tpu_custom_call.1} parent=1 // pred_check_branch
      %144 = sbr.rel (0) target = $region29
    $region28: #{tpu_custom_call.1} parent=1 // pred_region
      %145 = dma.done [#allocation7], 128
    $region29: #{tpu_custom_call.1} parent=1 // pred_fallthru
      _
    %146 = vsyncpa [#allocation6], 1
    %147 = vsyncpa [#allocation7], 1

</llo_original>
